<compile_context>
chip_gen: v6e
topology: v6e:2x2x1
jax: 0.10.0
libtpu: 0.0.40
codegen_flags: <defaults>
</compile_context>

<pallas_src>
import math

import jax
import jax.numpy as jnp
from jax import lax
from jax.experimental import pallas as pl
from jax.experimental.pallas import tpu as pltpu

NEG_BIG = -9.0e15
BN_EPS = 1e-5
LANE = 128
SUBLANE = 8


def _graph_conv_kernel(x_ref, w0_ref, w1_ref, ablk_ref, diag_ref,
                       scale_ref, shift_ref, o_ref):
    """Single-block kernel: whole (padded) batch in one invocation.

    x_ref:     (Mp, Cin)       all batch rows flattened (row = b*N + n), rows padded to 8
    w0_ref:    (Cin, Cout_pad) W[0], lanes padded to 128
    w1_ref:    (Cin, Cout_pad) W[1], lanes padded to 128
    ablk_ref:  (Mp, Mp)        kron(I_B, softmax(adj_logits)*(1-eye))   (precomputed)
    diag_ref:  (Mp, 1)         tiled diag(softmax(adj_logits))           (precomputed)
    scale_ref, shift_ref: (1, Cout_pad)  folded BN scale / (bias + BN) shift
    o_ref:     (Mp, Cout_pad)
    """
    x = x_ref[...]

    # Two lane-dense projections on the MXU (no lane-offset slicing).
    h0 = jnp.dot(x, w0_ref[...], preferred_element_type=jnp.float32)   # (Mp, Cp)
    h1 = jnp.dot(x, w1_ref[...], preferred_element_type=jnp.float32)   # (Mp, Cp)

    # Whole-batch neighbour aggregation: one block-diagonal MXU matmul.
    neigh = jnp.dot(ablk_ref[...], h1, preferred_element_type=jnp.float32)  # (Mp, Cp)

    # Self-loop term is a VPU row-scale; epilogue (folded BN + bias + ReLU)
    # applied once over the full block, single unmasked bulk store.
    out = diag_ref[...] * h0 + neigh
    o_ref[...] = jnp.maximum(out * scale_ref[...] + shift_ref[...], 0.0)


def graph_conv_forward(x, W, adj, e, bias, gamma, beta,
                       running_mean, running_var, eps=BN_EPS):
    """Pallas-backed forward of _GraphConv.

    x:   (B, N, Cin) float32
    W:   (2, Cin, Cout) float32
    adj: (N, N) binary float32
    e:   (N, N) float32
    bias, gamma, beta, running_mean, running_var: (Cout,) float32
    returns (B, N, Cout) float32
    """
    B, N, Cin = x.shape
    Cout = W.shape[2]

    M = B * N
    Mp = ((M + SUBLANE - 1) // SUBLANE) * SUBLANE          # sublane-aligned rows
    Cp = ((Cout + LANE - 1) // LANE) * LANE                # lane-dense channels

    # ---- batch-invariant adjacency preprocessing (hoisted out of the kernel) ----
    logits = adj * e + (1.0 - adj) * NEG_BIG               # matches torch for binary adj
    a_sm = jax.nn.softmax(logits, axis=-1)                 # rows sum to 1
    eye = jnp.eye(N, dtype=jnp.float32)
    diag_vec = jnp.diag(a_sm)                              # (N,)
    a_off = a_sm * (1.0 - eye)                             # (N, N)

    # Block-diagonal expansion over batch -> one MXU matmul in the kernel.
    a_blk = jnp.kron(jnp.eye(B, dtype=jnp.float32), a_off)          # (M, M)
    diag_full = jnp.tile(diag_vec, B).reshape(M, 1)                  # (M, 1)

    # ---- fold BN (inference) and bias into per-channel scale/shift, lane-padded ----
    scale = gamma / jnp.sqrt(running_var + eps)
    shift = bias * scale + (beta - running_mean * scale)
    scale_p = jnp.zeros((1, Cp), jnp.float32).at[0, :Cout].set(scale)
    shift_p = jnp.zeros((1, Cp), jnp.float32).at[0, :Cout].set(shift)

    # ---- lane-dense padded projection weights (two separate matmuls, no concat) ----
    w0 = jnp.zeros((Cin, Cp), jnp.float32).at[:, :Cout].set(W[0])
    w1 = jnp.zeros((Cin, Cp), jnp.float32).at[:, :Cout].set(W[1])

    x2d = x.reshape(M, Cin)
    if Mp != M:                                            # sublane-pad rows if needed
        x2d = jnp.pad(x2d, ((0, Mp - M), (0, 0)))
        a_blk = jnp.pad(a_blk, ((0, Mp - M), (0, Mp - M)))
        diag_full = jnp.pad(diag_full, ((0, Mp - M), (0, 0)))

    out2d = pl.pallas_call(
        _graph_conv_kernel,
        out_shape=jax.ShapeDtypeStruct((Mp, Cp), jnp.float32),
        grid=(1,),                                         # single step: tiny, latency-bound
        in_specs=[
            pl.BlockSpec((Mp, Cin), lambda i: (0, 0)),     # x (all batch rows)
            pl.BlockSpec((Cin, Cp), lambda i: (0, 0)),     # W0 (lane padded)
            pl.BlockSpec((Cin, Cp), lambda i: (0, 0)),     # W1 (lane padded)
            pl.BlockSpec((Mp, Mp), lambda i: (0, 0)),      # block-diag A_off
            pl.BlockSpec((Mp, 1), lambda i: (0, 0)),       # tiled diag
            pl.BlockSpec((1, Cp), lambda i: (0, 0)),       # BN scale
            pl.BlockSpec((1, Cp), lambda i: (0, 0)),       # bias + BN shift (fused)
        ],
        out_specs=pl.BlockSpec((Mp, Cp), lambda i: (0, 0)),
        compiler_params=pltpu.CompilerParams(
            dimension_semantics=("arbitrary",)),
    )(x2d, w0, w1, a_blk, diag_full, scale_p, shift_p)

    return out2d[:M, :Cout].reshape(B, N, Cout)


def _reference_forward(x, W, adj, e, bias, gamma, beta,
                       running_mean, running_var, eps=BN_EPS):
    """Pure-JAX reference of the PyTorch module (inference-mode BN)."""
    N = adj.shape[0]
    h0 = jnp.matmul(x, W[0], precision=lax.Precision.HIGHEST)
    h1 = jnp.matmul(x, W[1], precision=lax.Precision.HIGHEST)
    logits = adj * e + (1.0 - adj) * NEG_BIG
    a_sm = jax.nn.softmax(logits, axis=-1)
    eye = jnp.eye(N, dtype=jnp.float32)
    out = (jnp.matmul(a_sm * eye, h0, precision=lax.Precision.HIGHEST)
           + jnp.matmul(a_sm * (1.0 - eye), h1, precision=lax.Precision.HIGHEST))
    out = out + bias.reshape(1, 1, -1)
    scale = gamma / jnp.sqrt(running_var + eps)
    shift = beta - running_mean * scale
    out = out * scale + shift
    return jnp.maximum(out, 0.0)


if __name__ == "__main__":
    B, N, Cin, Cout = 2, 16, 32, 32   # batch, nodes (joints), in/out feature dims

    key = jax.random.PRNGKey(0)
    k_x, k_w, k_b = jax.random.split(key, 3)

    # input
    x = jax.random.normal(k_x, (B, N, Cin), dtype=jnp.float32)

    # W: (2, Cin, Cout), xavier_uniform-style deterministic init (gain=1.414)
    bound = 1.414 * math.sqrt(6.0 / (Cin + Cout))
    W = jax.random.uniform(k_w, (2, Cin, Cout), minval=-bound, maxval=bound,
                           dtype=jnp.float32)

    # bias: uniform(-stdv, stdv), stdv = 1/sqrt(out_features)
    stdv = 1.0 / math.sqrt(Cout)
    bias = jax.random.uniform(k_b, (Cout,), minval=-stdv, maxval=stdv,
                              dtype=jnp.float32)

    # adjacency: chain graph with self-loops (binary), e initialized to ones
    idx = jnp.arange(N)
    adj = (jnp.abs(idx[:, None] - idx[None, :]) <= 1).astype(jnp.float32)
    e = jnp.ones((N, N), dtype=jnp.float32)

    # BatchNorm1d params / running stats (inference mode, fresh init)
    gamma = jnp.ones((Cout,), jnp.float32)
    beta = jnp.zeros((Cout,), jnp.float32)
    running_mean = jnp.zeros((Cout,), jnp.float32)
    running_var = jnp.ones((Cout,), jnp.float32)

    out = graph_conv_forward(x, W, adj, e, bias, gamma, beta,
                             running_mean, running_var)
    jax.block_until_ready(out)
    assert out.shape == (B, N, Cout) and out.dtype == jnp.float32
    assert bool(jnp.all(jnp.isfinite(out)))

    ref = _reference_forward(x, W, adj, e, bias, gamma, beta,
                             running_mean, running_var)
    jax.block_until_ready(ref)
    assert bool(jnp.allclose(out, ref, rtol=1e-3, atol=1e-3)), "mismatch vs reference"

    print("KERNEL_OK")
</pallas_src>

<mosaic_0001>
module attributes {stable_mosaic.version = 11 : i64} {
  func.func @_graph_conv_kernel(%arg0: i32, %arg1: memref<32x32xf32, #tpu.memory_space<vmem>>, %arg2: memref<32x128xf32, #tpu.memory_space<vmem>>, %arg3: memref<32x128xf32, #tpu.memory_space<vmem>>, %arg4: memref<32x32xf32, #tpu.memory_space<vmem>>, %arg5: memref<32x1xf32, #tpu.memory_space<vmem>>, %arg6: memref<1x128xf32, #tpu.memory_space<vmem>>, %arg7: memref<1x128xf32, #tpu.memory_space<vmem>>, %arg8: memref<32x128xf32, #tpu.memory_space<vmem>>) attributes {dimension_semantics = [#tpu.dimension_semantics<arbitrary>], iteration_bounds = array<i64: 1>, scalar_prefetch = 0 : i64, scratch_operands = 0 : i64, tpu.core_type = #tpu.core_type<tc>, window_params = [{pipeline_mode = #tpu.pipeline_mode<synchronous>, transform_indices = @transform_0, window_bounds = array<i64: 32, 32>}, {pipeline_mode = #tpu.pipeline_mode<synchronous>, transform_indices = @transform_1, window_bounds = array<i64: 32, 128>}, {pipeline_mode = #tpu.pipeline_mode<synchronous>, transform_indices = @transform_2, window_bounds = array<i64: 32, 128>}, {pipeline_mode = #tpu.pipeline_mode<synchronous>, transform_indices = @transform_3, window_bounds = array<i64: 32, 32>}, {pipeline_mode = #tpu.pipeline_mode<synchronous>, transform_indices = @transform_4, window_bounds = array<i64: 32, 1>}, {pipeline_mode = #tpu.pipeline_mode<synchronous>, transform_indices = @transform_5, window_bounds = array<i64: 1, 128>}, {pipeline_mode = #tpu.pipeline_mode<synchronous>, transform_indices = @transform_6, window_bounds = array<i64: 1, 128>}, {pipeline_mode = #tpu.pipeline_mode<synchronous>, transform_indices = @transform_7, window_bounds = array<i64: 32, 128>}]} {
    %c0 = arith.constant 0 : index
    %c0_0 = arith.constant 0 : index
    %0 = vector.load %arg1[%c0, %c0_0] : memref<32x32xf32, #tpu.memory_space<vmem>>, vector<32x32xf32>
    %c0_1 = arith.constant 0 : index
    %c0_2 = arith.constant 0 : index
    %1 = vector.load %arg2[%c0_1, %c0_2] : memref<32x128xf32, #tpu.memory_space<vmem>>, vector<32x128xf32>
    %cst = arith.constant dense<0.000000e+00> : vector<32x128xf32>
    %2 = tpu.matmul %0, %1, %cst {dimension_numbers = #tpu.dot_dimension_numbers<[1], [0], [0], [1], [0, 0, 1, 1], [], []>} : vector<32x32xf32>, vector<32x128xf32>, vector<32x128xf32> -> vector<32x128xf32>
    %c0_3 = arith.constant 0 : index
    %c0_4 = arith.constant 0 : index
    %3 = vector.load %arg3[%c0_3, %c0_4] : memref<32x128xf32, #tpu.memory_space<vmem>>, vector<32x128xf32>
    %cst_5 = arith.constant dense<0.000000e+00> : vector<32x128xf32>
    %4 = tpu.matmul %0, %3, %cst_5 {dimension_numbers = #tpu.dot_dimension_numbers<[1], [0], [0], [1], [0, 0, 1, 1], [], []>} : vector<32x32xf32>, vector<32x128xf32>, vector<32x128xf32> -> vector<32x128xf32>
    %c0_6 = arith.constant 0 : index
    %c0_7 = arith.constant 0 : index
    %5 = vector.load %arg4[%c0_6, %c0_7] : memref<32x32xf32, #tpu.memory_space<vmem>>, vector<32x32xf32>
    %cst_8 = arith.constant dense<0.000000e+00> : vector<32x128xf32>
    %6 = tpu.matmul %5, %4, %cst_8 {dimension_numbers = #tpu.dot_dimension_numbers<[1], [0], [0], [1], [0, 0, 1, 1], [], []>} : vector<32x32xf32>, vector<32x128xf32>, vector<32x128xf32> -> vector<32x128xf32>
    %c0_9 = arith.constant 0 : index
    %c0_10 = arith.constant 0 : index
    %7 = vector.load %arg5[%c0_9, %c0_10] : memref<32x1xf32, #tpu.memory_space<vmem>>, vector<32x1xf32>
    %8 = vector.broadcast %7 : vector<32x1xf32> to vector<32x128xf32>
    %9 = arith.mulf %8, %2 : vector<32x128xf32>
    %10 = arith.addf %9, %6 : vector<32x128xf32>
    %c0_11 = arith.constant 0 : index
    %c0_12 = arith.constant 0 : index
    %11 = vector.load %arg6[%c0_11, %c0_12] : memref<1x128xf32, #tpu.memory_space<vmem>>, vector<1x128xf32>
    %12 = vector.broadcast %11 : vector<1x128xf32> to vector<32x128xf32>
    %13 = arith.mulf %10, %12 : vector<32x128xf32>
    %c0_13 = arith.constant 0 : index
    %c0_14 = arith.constant 0 : index
    %14 = vector.load %arg7[%c0_13, %c0_14] : memref<1x128xf32, #tpu.memory_space<vmem>>, vector<1x128xf32>
    %15 = vector.broadcast %14 : vector<1x128xf32> to vector<32x128xf32>
    %16 = arith.addf %13, %15 : vector<32x128xf32>
    %cst_15 = arith.constant 0.000000e+00 : f32
    %17 = vector.broadcast %cst_15 : f32 to vector<32x128xf32>
    %18 = arith.maximumf %16, %17 : vector<32x128xf32>
    %c0_16 = arith.constant 0 : index
    %c0_17 = arith.constant 0 : index
    %19 = vector.load %arg8[%c0_16, %c0_17] : memref<32x128xf32, #tpu.memory_space<vmem>>, vector<32x128xf32>
    tpu.vector_store %arg8[%c0_16, %c0_17], %18 {strides = array<i32>} : memref<32x128xf32, #tpu.memory_space<vmem>>, vector<32x128xf32>,
    return
  }
  func.func @transform_0(%arg0: i32) -> (i32, i32) {
    %c0_i32 = arith.constant 0 : i32
    %c0_i32_0 = arith.constant 0 : i32
    %c0_i32_1 = arith.constant 0 : i32
    return %c0_i32, %c0_i32_0 : i32, i32
  }
  func.func @transform_1(%arg0: i32) -> (i32, i32) {
    %c0_i32 = arith.constant 0 : i32
    %c0_i32_0 = arith.constant 0 : i32
    %c0_i32_1 = arith.constant 0 : i32
    return %c0_i32, %c0_i32_0 : i32, i32
  }
  func.func @transform_2(%arg0: i32) -> (i32, i32) {
    %c0_i32 = arith.constant 0 : i32
    %c0_i32_0 = arith.constant 0 : i32
    %c0_i32_1 = arith.constant 0 : i32
    return %c0_i32, %c0_i32_0 : i32, i32
  }
  func.func @transform_3(%arg0: i32) -> (i32, i32) {
    %c0_i32 = arith.constant 0 : i32
    %c0_i32_0 = arith.constant 0 : i32
    %c0_i32_1 = arith.constant 0 : i32
    return %c0_i32, %c0_i32_0 : i32, i32
  }
  func.func @transform_4(%arg0: i32) -> (i32, i32) {
    %c0_i32 = arith.constant 0 : i32
    %c0_i32_0 = arith.constant 0 : i32
    %c0_i32_1 = arith.constant 0 : i32
    return %c0_i32, %c0_i32_0 : i32, i32
  }
  func.func @transform_5(%arg0: i32) -> (i32, i32) {
    %c0_i32 = arith.constant 0 : i32
    %c0_i32_0 = arith.constant 0 : i32
    %c0_i32_1 = arith.constant 0 : i32
    return %c0_i32, %c0_i32_0 : i32, i32
  }
  func.func @transform_6(%arg0: i32) -> (i32, i32) {
    %c0_i32 = arith.constant 0 : i32
    %c0_i32_0 = arith.constant 0 : i32
    %c0_i32_1 = arith.constant 0 : i32
    return %c0_i32, %c0_i32_0 : i32, i32
  }
  func.func @transform_7(%arg0: i32) -> (i32, i32) {
    %c0_i32 = arith.constant 0 : i32
    %c0_i32_0 = arith.constant 0 : i32
    %c0_i32_1 = arith.constant 0 : i32
    return %c0_i32, %c0_i32_0 : i32, i32
  }
}

</mosaic_0001>

<llo_original>
// kernel: tpu_custom_call.1
$region0: #{tpu_custom_call.1}
  #allocation0 [shape = 'u32[]', space=smem, size = 0x4, offset = 0x4, fixed_abs, tag = 'smem constant byte address 0x4 - core index']
  #allocation1 [shape = 'u32[144,128]{1,0:T(1,128)}', space=vmem, size = 0x12000, scoped, tag = 'internal scratch']
  %s0 = inlined_call_operand.vmem [shape: f32[32,32], index: 0, kind: input, shape index: {}]
  %s1 = inlined_call_operand.hbm [shape: f32[32,128], index: 1, kind: input, shape index: {}]
  %s2 = inlined_call_operand.hbm [shape: f32[32,128], index: 2, kind: input, shape index: {}]
  %s3 = inlined_call_operand.hbm [shape: f32[32,32], index: 3, kind: input, shape index: {}]
  %s4 = inlined_call_operand.vmem [shape: f32[32,1], index: 4, kind: input, shape index: {}]
  %s5 = inlined_call_operand.vmem [shape: f32[1,128], index: 5, kind: input, shape index: {}]
  %s6 = inlined_call_operand.vmem [shape: f32[1,128], index: 6, kind: input, shape index: {}]
  %s7 = inlined_call_operand.hbm [shape: f32[32,128], index: 7, kind: output, shape index: {}]
  %s8 = sld [smem:[#allocation0]]
  $region50: #{tpu_custom_call.1} parent=0
    _
  %s10 = ssub.s32 1, %s8
  %s11 = scalar_select 0, %s10, %s8
  $region1: #{tpu_custom_call.1} parent=0
    #allocation2 [shape = 'u8[16384]{0}', space=vmem, size = 0x4000, scoped, tag = 'input window, operand 1, single buffered']
    #allocation3 [shape = 's32[1]{0}', space=sflag, size = 0x4, scoped, tag = 'scoped memory for tpu_custom_call.1']
    #allocation4 [shape = 's32[1]{0}', space=sflag, size = 0x4, scoped, tag = 'scoped memory for tpu_custom_call.1']
    #allocation5 [shape = 'u8[16384]{0}', space=vmem, size = 0x4000, scoped, tag = 'input window, operand 2, single buffered']
    #allocation6 [shape = 's32[1]{0}', space=sflag, size = 0x4, scoped, tag = 'scoped memory for tpu_custom_call.1']
    #allocation7 [shape = 'u8[16384]{0}', space=vmem, size = 0x4000, scoped, tag = 'input window, operand 3, single buffered']
    #allocation8 [shape = 'u8[16384]{0}', space=vmem, size = 0x4000, scoped, tag = 'output window, operand 0, single buffered']
    %12 = vsyncpa [#allocation3], 0
    %13 = vsyncpa [#allocation6], 0
    %14 = vsyncpa [#allocation4], 0
    // Predicated region
    $region2: #{tpu_custom_call.1} parent=1 // pred_check
      _
    $region3: #{tpu_custom_call.1} parent=1 // pred_check_branch
      %16 = sbr.rel (0) target = $region5
    $region4: #{tpu_custom_call.1} parent=1 // pred_region
      _
    $region5: #{tpu_custom_call.1} parent=1 // pred_fallthru
      _
    // Predicated region
    $region6: #{tpu_custom_call.1} parent=1 // pred_check
      _
    $region7: #{tpu_custom_call.1} parent=1 // pred_check_branch
      %18 = sbr.rel (0) target = $region9
    $region8: #{tpu_custom_call.1} parent=1 // pred_region
      %s20 = ssub.s32 512, 512
      %21 = vsyncadd [#allocation3], %s20
      %s22 = sshll.u32 [#allocation2], 4
      %s23 = int_to_ptr.vmem [resolvable:$true] %s22
      %28 = dma.hbm_to_vmem [thread:$0]  %s1, 512, %s23, [#allocation3], 128, 128, 8
    $region9: #{tpu_custom_call.1} parent=1 // pred_fallthru
      _
    // Predicated region
    $region10: #{tpu_custom_call.1} parent=1 // pred_check
      _
    $region11: #{tpu_custom_call.1} parent=1 // pred_check_branch
      %30 = sbr.rel (0) target = $region13
    $region12: #{tpu_custom_call.1} parent=1 // pred_region
      %s32 = ssub.s32 512, 512
      %33 = vsyncadd [#allocation6], %s32
      %s34 = sshll.u32 [#allocation5], 4
      %s35 = int_to_ptr.vmem [resolvable:$true] %s34
      %40 = dma.hbm_to_vmem [thread:$0]  %s2, 512, %s35, [#allocation6], 128, 128, 8
    $region13: #{tpu_custom_call.1} parent=1 // pred_fallthru
      _
    // Predicated region
    $region14: #{tpu_custom_call.1} parent=1 // pred_check
      _
    $region15: #{tpu_custom_call.1} parent=1 // pred_check_branch
      %42 = sbr.rel (0) target = $region17
    $region16: #{tpu_custom_call.1} parent=1 // pred_region
      %s44 = ssub.s32 512, 512
      %45 = vsyncadd [#allocation6], %s44
      %s46 = sshll.u32 [#allocation7], 4
      %s47 = int_to_ptr.vmem [resolvable:$true] %s46
      %52 = dma.hbm_to_vmem [thread:$0]  %s3, 512, %s47, [#allocation6], 128, 128, 8
    $region17: #{tpu_custom_call.1} parent=1 // pred_fallthru
      _
    // Predicated region
    $region18: #{tpu_custom_call.1} parent=1 // pred_check
      _
    $region19: #{tpu_custom_call.1} parent=1 // pred_check_branch
      %54 = sbr.rel (0) target = $region21
    $region20: #{tpu_custom_call.1} parent=1 // pred_region
      _
    $region21: #{tpu_custom_call.1} parent=1 // pred_fallthru
      _
    // Predicated region
    $region22: #{tpu_custom_call.1} parent=1 // pred_check
      _
    $region23: #{tpu_custom_call.1} parent=1 // pred_check_branch
      %56 = sbr.rel (0) target = $region25
    $region24: #{tpu_custom_call.1} parent=1 // pred_region
      _
    $region25: #{tpu_custom_call.1} parent=1 // pred_fallthru
      _
    // Predicated region
    $region26: #{tpu_custom_call.1} parent=1 // pred_check
      _
    $region27: #{tpu_custom_call.1} parent=1 // pred_check_branch
      %58 = sbr.rel (0) target = $region29
    $region28: #{tpu_custom_call.1} parent=1 // pred_region
      _
    $region29: #{tpu_custom_call.1} parent=1 // pred_fallthru
      _
    // Predicated region
    $region30: #{tpu_custom_call.1} parent=1 // pred_check
      _
    $region31: #{tpu_custom_call.1} parent=1 // pred_check_branch
      %60 = sbr.rel (0) target = $region33
    $region32: #{tpu_custom_call.1} parent=1 // pred_region
      %61 = dma.done [#allocation3], 512
    $region33: #{tpu_custom_call.1} parent=1 // pred_fallthru
      _
    // Predicated region
    $region34: #{tpu_custom_call.1} parent=1 // pred_check
      _
    $region35: #{tpu_custom_call.1} parent=1 // pred_check_branch
      %63 = sbr.rel (0) target = $region37
    $region36: #{tpu_custom_call.1} parent=1 // pred_region
      %64 = dma.done [#allocation6], 512
    $region37: #{tpu_custom_call.1} parent=1 // pred_fallthru
      _
    // Predicated region
    $region38: #{tpu_custom_call.1} parent=1 // pred_check
      _
    $region39: #{tpu_custom_call.1} parent=1 // pred_check_branch
      %66 = sbr.rel (0) target = $region41
    $region40: #{tpu_custom_call.1} parent=1 // pred_region
      %67 = dma.done [#allocation6], 512
    $region41: #{tpu_custom_call.1} parent=1 // pred_fallthru
      _
    %v68 = vld [vmem:[%s0] sm:$0xff]
    %v69 = vld [vmem:[%s0 + $0x8] sm:$0xff]
    %v70 = vld [vmem:[%s0 + $0x10] sm:$0xff]
    %v71 = vld [vmem:[%s0 + $0x18] sm:$0xff]
    %v72 = vld [vmem:[#allocation2] sm:$0xff]
    %v73 = vld [vmem:[#allocation2 + $0x8] sm:$0xff]
    %v74 = vld [vmem:[#allocation2 + $0x10] sm:$0xff]
    %v75 = vld [vmem:[#allocation2 + $0x18] sm:$0xff]
    %vm76 = vcmask 261120
    %v78 = vsel %vm76, %v68, 0
    %v81 = vsel %vm76, %v69, 0
    %v84 = vsel %vm76, %v70, 0
    %v87 = vsel %vm76, %v71, 0
    %89 = vmatprep.subr.mxu0 0.0
    %90 = vmatpush1.msra.mxu0 0.0
    %91 = vmatprep.subr.mxu0 0.0
    %92 = vmatpush1.msra.mxu0 0.0
    %93 = vmatprep.subr.mxu0 0.0
    %94 = vmatpush1.msra.mxu0 0.0
    %95 = vmatprep.subr.mxu0 0.0
    %96 = vmatpush1.msra.mxu0 0.0
    %97 = vmatprep.subr.mxu0 0.0
    %98 = vmatpush1.msra.mxu0 0.0
    %99 = vmatprep.subr.mxu0 0.0
    %100 = vmatpush1.msra.mxu0 0.0
    %101 = vmatprep.subr.mxu0 0.0
    %102 = vmatpush1.msra.mxu0 0.0
    %103 = vmatprep.subr.mxu0 0.0
    %104 = vmatpush1.msra.mxu0 0.0
    %105 = vmatprep.subr.mxu0 0.0
    %106 = vmatpush1.msra.mxu0 0.0
    %107 = vmatprep.subr.mxu0 0.0
    %108 = vmatpush1.msra.mxu0 0.0
    %109 = vmatprep.subr.mxu0 0.0
    %110 = vmatpush1.msra.mxu0 0.0
    %111 = vmatprep.subr.mxu0 0.0
    %112 = vmatpush1.msra.mxu0 0.0
    %113 = vmatprep.subr.mxu0 0.0
    %114 = vmatpush1.msra.mxu0 %v75
    %115 = vmatprep.subr.mxu0 0.0
    %116 = vmatpush1.msra.mxu0 %v74
    %117 = vmatprep.subr.mxu0 0.0
    %118 = vmatpush1.msra.mxu0 %v73
    %119 = vmatprep.subr.mxu0 0.0
    %120 = vmatpush1.msra.mxu0 %v72
    %121 = vmatprep.subr.mxu0 0.0
    %122 = vmatpush2.msra.mxu0 0.0
    %123 = vmatprep.subr.mxu0 0.0
    %124 = vmatpush2.msra.mxu0 0.0
    %125 = vmatprep.subr.mxu0 0.0
    %126 = vmatpush2.msra.mxu0 0.0
    %127 = vmatprep.subr.mxu0 0.0
    %128 = vmatpush2.msra.mxu0 0.0
    %129 = vmatprep.subr.mxu0 0.0
    %130 = vmatpush2.msra.mxu0 0.0
    %131 = vmatprep.subr.mxu0 0.0
    %132 = vmatpush2.msra.mxu0 0.0
    %133 = vmatprep.subr.mxu0 0.0
    %134 = vmatpush2.msra.mxu0 0.0
    %135 = vmatprep.subr.mxu0 0.0
    %136 = vmatpush2.msra.mxu0 0.0
    %137 = vmatprep.subr.mxu0 0.0
    %138 = vmatpush2.msra.mxu0 0.0
    %139 = vmatprep.subr.mxu0 0.0
    %140 = vmatpush2.msra.mxu0 0.0
    %141 = vmatprep.subr.mxu0 0.0
    %142 = vmatpush2.msra.mxu0 0.0
    %143 = vmatprep.subr.mxu0 0.0
    %144 = vmatpush2.msra.mxu0 0.0
    %145 = vmatprep.subr.mxu0 0.0
    %146 = vmatpush2.msra.mxu0 0.0
    %147 = vmatprep.subr.mxu0 0.0
    %148 = vmatpush2.msra.mxu0 0.0
    %149 = vmatprep.subr.mxu0 0.0
    %150 = vmatpush2.msra.mxu0 0.0
    %151 = vmatprep.subr.mxu0 0.0
    %152 = vmatpush2.msra.mxu0 0.0
    %153 = vmatprep.mubr.f32.mxu0 0.0
    %154 = vmatmul.mubr.f32.gmra.mxu0 %v78
    %v155 = vpop.f32.mrf.mxu0
    %v156 = vadd.f32 0.0, %v155
    %v157 = vpop.f32.mrf.mxu0
    %158 = vmatprep.mubr.f32.mxu0 0.0
    %159 = vmatmul.mubr.f32.gmra.mxu0 %v81
    %v160 = vpop.f32.mrf.mxu0
    %v161 = vadd.f32 0.0, %v160
    %v162 = vpop.f32.mrf.mxu0
    %163 = vmatprep.mubr.f32.mxu0 0.0
    %164 = vmatmul.mubr.f32.gmra.mxu0 %v84
    %v165 = vpop.f32.mrf.mxu0
    %v166 = vadd.f32 0.0, %v165
    %v167 = vpop.f32.mrf.mxu0
    %168 = vmatprep.mubr.f32.mxu0 0.0
    %169 = vmatmul.mubr.f32.gmra.mxu0 %v87
    %v170 = vpop.f32.mrf.mxu0
    %v171 = vadd.f32 0.0, %v170
    %v172 = vpop.f32.mrf.mxu0
    %173 = vdwg.mxu0
    %v174 = vld [vmem:[#allocation5] sm:$0xff]
    %v175 = vld [vmem:[#allocation5 + $0x8] sm:$0xff]
    %v176 = vld [vmem:[#allocation5 + $0x10] sm:$0xff]
    %v177 = vld [vmem:[#allocation5 + $0x18] sm:$0xff]
    %178 = vmatprep.subr.mxu0 0.0
    %179 = vmatpush1.msra.mxu0 0.0
    %180 = vmatprep.subr.mxu0 0.0
    %181 = vmatpush1.msra.mxu0 0.0
    %182 = vmatprep.subr.mxu0 0.0
    %183 = vmatpush1.msra.mxu0 0.0
    %184 = vmatprep.subr.mxu0 0.0
    %185 = vmatpush1.msra.mxu0 0.0
    %186 = vmatprep.subr.mxu0 0.0
    %187 = vmatpush1.msra.mxu0 0.0
    %188 = vmatprep.subr.mxu0 0.0
    %189 = vmatpush1.msra.mxu0 0.0
    %190 = vmatprep.subr.mxu0 0.0
    %191 = vmatpush1.msra.mxu0 0.0
    %192 = vmatprep.subr.mxu0 0.0
    %193 = vmatpush1.msra.mxu0 0.0
    %194 = vmatprep.subr.mxu0 0.0
    %195 = vmatpush1.msra.mxu0 0.0
    %196 = vmatprep.subr.mxu0 0.0
    %197 = vmatpush1.msra.mxu0 0.0
    %198 = vmatprep.subr.mxu0 0.0
    %199 = vmatpush1.msra.mxu0 0.0
    %200 = vmatprep.subr.mxu0 0.0
    %201 = vmatpush1.msra.mxu0 0.0
    %202 = vmatprep.subr.mxu0 0.0
    %203 = vmatpush1.msra.mxu0 %v177
    %204 = vmatprep.subr.mxu0 0.0
    %205 = vmatpush1.msra.mxu0 %v176
    %206 = vmatprep.subr.mxu0 0.0
    %207 = vmatpush1.msra.mxu0 %v175
    %208 = vmatprep.subr.mxu0 0.0
    %209 = vmatpush1.msra.mxu0 %v174
    %210 = vmatprep.subr.mxu0 0.0
    %211 = vmatpush2.msra.mxu0 0.0
    %212 = vmatprep.subr.mxu0 0.0
    %213 = vmatpush2.msra.mxu0 0.0
    %214 = vmatprep.subr.mxu0 0.0
    %215 = vmatpush2.msra.mxu0 0.0
    %216 = vmatprep.subr.mxu0 0.0
    %217 = vmatpush2.msra.mxu0 0.0
    %218 = vmatprep.subr.mxu0 0.0
    %219 = vmatpush2.msra.mxu0 0.0
    %220 = vmatprep.subr.mxu0 0.0
    %221 = vmatpush2.msra.mxu0 0.0
    %222 = vmatprep.subr.mxu0 0.0
    %223 = vmatpush2.msra.mxu0 0.0
    %224 = vmatprep.subr.mxu0 0.0
    %225 = vmatpush2.msra.mxu0 0.0
    %226 = vmatprep.subr.mxu0 0.0
    %227 = vmatpush2.msra.mxu0 0.0
    %228 = vmatprep.subr.mxu0 0.0
    %229 = vmatpush2.msra.mxu0 0.0
    %230 = vmatprep.subr.mxu0 0.0
    %231 = vmatpush2.msra.mxu0 0.0
    %232 = vmatprep.subr.mxu0 0.0
    %233 = vmatpush2.msra.mxu0 0.0
    %234 = vmatprep.subr.mxu0 0.0
    %235 = vmatpush2.msra.mxu0 0.0
    %236 = vmatprep.subr.mxu0 0.0
    %237 = vmatpush2.msra.mxu0 0.0
    %238 = vmatprep.subr.mxu0 0.0
    %239 = vmatpush2.msra.mxu0 0.0
    %240 = vmatprep.subr.mxu0 0.0
    %241 = vmatpush2.msra.mxu0 0.0
    %242 = vmatprep.mubr.f32.mxu0 0.0
    %243 = vmatmul.mubr.f32.gmra.mxu0 %v78
    %v244 = vpop.f32.mrf.mxu0
    %v245 = vadd.f32 0.0, %v244
    %v246 = vpop.f32.mrf.mxu0
    %247 = vmatprep.mubr.f32.mxu0 0.0
    %248 = vmatmul.mubr.f32.gmra.mxu0 %v81
    %v249 = vpop.f32.mrf.mxu0
    %v250 = vadd.f32 0.0, %v249
    %v251 = vpop.f32.mrf.mxu0
    %252 = vmatprep.mubr.f32.mxu0 0.0
    %253 = vmatmul.mubr.f32.gmra.mxu0 %v84
    %v254 = vpop.f32.mrf.mxu0
    %v255 = vadd.f32 0.0, %v254
    %v256 = vpop.f32.mrf.mxu0
    %257 = vmatprep.mubr.f32.mxu0 0.0
    %258 = vmatmul.mubr.f32.gmra.mxu0 %v87
    %v259 = vpop.f32.mrf.mxu0
    %v260 = vadd.f32 0.0, %v259
    %v261 = vpop.f32.mrf.mxu0
    %262 = vdwg.mxu0
    %v263 = vld [vmem:[#allocation7] sm:$0xff]
    %v264 = vld [vmem:[#allocation7 + $0x8] sm:$0xff]
    %v265 = vld [vmem:[#allocation7 + $0x10] sm:$0xff]
    %v266 = vld [vmem:[#allocation7 + $0x18] sm:$0xff]
    %v268 = vsel %vm76, %v263, 0
    %v271 = vsel %vm76, %v264, 0
    %v274 = vsel %vm76, %v265, 0
    %v277 = vsel %vm76, %v266, 0
    %279 = vmatprep.subr.mxu0 0.0
    %280 = vmatpush1.msra.mxu0 0.0
    %281 = vmatprep.subr.mxu0 0.0
    %282 = vmatpush1.msra.mxu0 0.0
    %283 = vmatprep.subr.mxu0 0.0
    %284 = vmatpush1.msra.mxu0 0.0
    %285 = vmatprep.subr.mxu0 0.0
    %286 = vmatpush1.msra.mxu0 0.0
    %287 = vmatprep.subr.mxu0 0.0
    %288 = vmatpush1.msra.mxu0 0.0
    %289 = vmatprep.subr.mxu0 0.0
    %290 = vmatpush1.msra.mxu0 0.0
    %291 = vmatprep.subr.mxu0 0.0
    %292 = vmatpush1.msra.mxu0 0.0
    %293 = vmatprep.subr.mxu0 0.0
    %294 = vmatpush1.msra.mxu0 0.0
    %295 = vmatprep.subr.mxu0 0.0
    %296 = vmatpush1.msra.mxu0 0.0
    %297 = vmatprep.subr.mxu0 0.0
    %298 = vmatpush1.msra.mxu0 0.0
    %299 = vmatprep.subr.mxu0 0.0
    %300 = vmatpush1.msra.mxu0 0.0
    %301 = vmatprep.subr.mxu0 0.0
    %302 = vmatpush1.msra.mxu0 0.0
    %303 = vmatprep.subr.mxu0 0.0
    %304 = vmatpush1.msra.mxu0 %v260
    %305 = vmatprep.subr.mxu0 0.0
    %306 = vmatpush1.msra.mxu0 %v255
    %307 = vmatprep.subr.mxu0 0.0
    %308 = vmatpush1.msra.mxu0 %v250
    %309 = vmatprep.subr.mxu0 0.0
    %310 = vmatpush1.msra.mxu0 %v245
    %311 = vmatprep.subr.mxu0 0.0
    %312 = vmatpush2.msra.mxu0 0.0
    %313 = vmatprep.subr.mxu0 0.0
    %314 = vmatpush2.msra.mxu0 0.0
    %315 = vmatprep.subr.mxu0 0.0
    %316 = vmatpush2.msra.mxu0 0.0
    %317 = vmatprep.subr.mxu0 0.0
    %318 = vmatpush2.msra.mxu0 0.0
    %319 = vmatprep.subr.mxu0 0.0
    %320 = vmatpush2.msra.mxu0 0.0
    %321 = vmatprep.subr.mxu0 0.0
    %322 = vmatpush2.msra.mxu0 0.0
    %323 = vmatprep.subr.mxu0 0.0
    %324 = vmatpush2.msra.mxu0 0.0
    %325 = vmatprep.subr.mxu0 0.0
    %326 = vmatpush2.msra.mxu0 0.0
    %327 = vmatprep.subr.mxu0 0.0
    %328 = vmatpush2.msra.mxu0 0.0
    %329 = vmatprep.subr.mxu0 0.0
    %330 = vmatpush2.msra.mxu0 0.0
    %331 = vmatprep.subr.mxu0 0.0
    %332 = vmatpush2.msra.mxu0 0.0
    %333 = vmatprep.subr.mxu0 0.0
    %334 = vmatpush2.msra.mxu0 0.0
    %335 = vmatprep.subr.mxu0 0.0
    %336 = vmatpush2.msra.mxu0 0.0
    %337 = vmatprep.subr.mxu0 0.0
    %338 = vmatpush2.msra.mxu0 0.0
    %339 = vmatprep.subr.mxu0 0.0
    %340 = vmatpush2.msra.mxu0 0.0
    %341 = vmatprep.subr.mxu0 0.0
    %342 = vmatpush2.msra.mxu0 0.0
    %343 = vmatprep.mubr.f32.mxu0 0.0
    %344 = vmatmul.mubr.f32.gmra.mxu0 %v268
    %v345 = vpop.f32.mrf.mxu0
    %v346 = vadd.f32 0.0, %v345
    %v347 = vpop.f32.mrf.mxu0
    %348 = vmatprep.mubr.f32.mxu0 0.0
    %349 = vmatmul.mubr.f32.gmra.mxu0 %v271
    %v350 = vpop.f32.mrf.mxu0
    %v351 = vadd.f32 0.0, %v350
    %v352 = vpop.f32.mrf.mxu0
    %353 = vmatprep.mubr.f32.mxu0 0.0
    %354 = vmatmul.mubr.f32.gmra.mxu0 %v274
    %v355 = vpop.f32.mrf.mxu0
    %v356 = vadd.f32 0.0, %v355
    %v357 = vpop.f32.mrf.mxu0
    %358 = vmatprep.mubr.f32.mxu0 0.0
    %359 = vmatmul.mubr.f32.gmra.mxu0 %v277
    %v360 = vpop.f32.mrf.mxu0
    %v361 = vadd.f32 0.0, %v360
    %v362 = vpop.f32.mrf.mxu0
    %363 = vdwg.mxu0
    %v364 = vld [vmem:[%s4] sm:$0xff]
    %v365 = vld [vmem:[%s4 + $0x8] sm:$0xff]
    %v366 = vld [vmem:[%s4 + $0x10] sm:$0xff]
    %v367 = vld [vmem:[%s4 + $0x18] sm:$0xff]
    %369 = vset.pattern.permute.xlu0 0
    %370 = vperm.xlu0 %369, %v364
    %v371 = vpop.permute.xlu0 %370
    %374 = vset.pattern.permute.xlu0 0
    %375 = vperm.xlu0 %374, %v365
    %v376 = vpop.permute.xlu0 %375
    %379 = vset.pattern.permute.xlu0 0
    %380 = vperm.xlu0 %379, %v366
    %v381 = vpop.permute.xlu0 %380
    %384 = vset.pattern.permute.xlu0 0
    %385 = vperm.xlu0 %384, %v367
    %v386 = vpop.permute.xlu0 %385
    %v388 = vmul.f32 %v371, %v156
    %v389 = vmul.f32 %v376, %v161
    %v390 = vmul.f32 %v381, %v166
    %v391 = vmul.f32 %v386, %v171
    %v392 = vadd.f32 %v388, %v346
    %v393 = vadd.f32 %v389, %v351
    %v394 = vadd.f32 %v390, %v356
    %v395 = vadd.f32 %v391, %v361
    %v396 = vld [vmem:[%s5] sm:$0x1]
    %v398 = vlaneseq
    %v399 = vshrl.u32 %v398, 7
    %v400 = vsub.s32 0, %v399
    %v401 = vrot.slane %v396, %v400
    %v403 = vmul.f32 %v392, %v401
    %v404 = vmul.f32 %v393, %v401
    %v405 = vmul.f32 %v394, %v401
    %v406 = vmul.f32 %v395, %v401
    %v407 = vld [vmem:[%s6] sm:$0x1]
    %v409 = vlaneseq
    %v410 = vshrl.u32 %v409, 7
    %v411 = vsub.s32 0, %v410
    %v412 = vrot.slane %v407, %v411
    %v414 = vadd.f32 %v403, %v412
    %v415 = vadd.f32 %v404, %v412
    %v416 = vadd.f32 %v405, %v412
    %v417 = vadd.f32 %v406, %v412
    %v418 = vmax.f32 %v414, 0.0
    %v419 = vmax.f32 %v415, 0.0
    %v420 = vmax.f32 %v416, 0.0
    %v421 = vmax.f32 %v417, 0.0
    %422 = vst [vmem:[#allocation8] sm:$0xff] %v418
    %423 = vst [vmem:[#allocation8 + $0x8] sm:$0xff] %v419
    %424 = vst [vmem:[#allocation8 + $0x10] sm:$0xff] %v420
    %425 = vst [vmem:[#allocation8 + $0x18] sm:$0xff] %v421
    // Predicated region
    $region42: #{tpu_custom_call.1} parent=1 // pred_check
      _
    $region43: #{tpu_custom_call.1} parent=1 // pred_check_branch
      %427 = sbr.rel (0) target = $region45
    $region44: #{tpu_custom_call.1} parent=1 // pred_region
      %s429 = ssub.s32 512, 512
      %430 = vsyncadd [#allocation4], %s429
      %s431 = sshll.u32 [#allocation8], 4
      %s432 = int_to_ptr.vmem [resolvable:$true] %s431
      %437 = dma.vmem_to_hbm [thread:$0]  %s432, 512, %s7, [#allocation4], 128, 128, 8
    $region45: #{tpu_custom_call.1} parent=1 // pred_fallthru
      _
    // Predicated region
    $region46: #{tpu_custom_call.1} parent=1 // pred_check
      _
    $region47: #{tpu_custom_call.1} parent=1 // pred_check_branch
      %439 = sbr.rel (0) target = $region49
    $region48: #{tpu_custom_call.1} parent=1 // pred_region
      %440 = dma.done [#allocation4], 512
    $region49: #{tpu_custom_call.1} parent=1 // pred_fallthru
      _
    %441 = vsyncpa [#allocation3], 1
    %442 = vsyncpa [#allocation6], 1
    %443 = vsyncpa [#allocation4], 1

</llo_original>
